<compile_context>
chip_gen: v5e
topology: v5e:2x2
jax: 0.10.0
libtpu: 0.0.40
codegen_flags: <defaults>
</compile_context>

<pallas_src>
import functools

import jax
import jax.numpy as jnp
from jax.experimental import pallas as pl
from jax.experimental.pallas import tpu as pltpu


_TM_PREF = 256     # row tile: multiple of 128/256 to match v5e / v6e-v7x MXU
_TH_PREF = 1024    # hidden-slab tile: bounds weight-block VMEM (fits v7x 64 MiB)
_SQRT_HALF = 0.7071067811865476


def _round_up(x, m):
    return (x + m - 1) // m * m


def _ffn_kernel(x_ref, w1_ref, b1_ref, w2_ref, b2_ref, o_ref, acc_ref):
    """One (tm, D) row tile x one hidden slab of width th.

    Grid = (M//tm, H//th). The H axis is the reduction for the second matmul,
    accumulated into the f32 VMEM scratch `acc_ref`.
    """
    h_idx = pl.program_id(1)

    @pl.when(h_idx == 0)
    def _():
        acc_ref[...] = jnp.zeros_like(acc_ref)

    # Linear 1: native-dtype operands straight into the MXU, f32 accumulation.
    h = jnp.dot(x_ref[...], w1_ref[...], preferred_element_type=jnp.float32)
    h = h + b1_ref[...].astype(jnp.float32)

    # Exact erf-based GELU (matches torch.nn.GELU default), f32 elementwise.
    g = 0.5 * h * (1.0 + jax.lax.erf(h * jnp.float32(_SQRT_HALF)))

    # Dropout(p=0.0) / eval mode is identity.
    # TODO(synk): training-mode dropout>0 would need pltpu.prng_* masking.

    # Linear 2 (partial contribution of this hidden slab), f32 accumulate.
    acc_ref[...] += jnp.dot(g.astype(w2_ref.dtype), w2_ref[...],
                            preferred_element_type=jnp.float32)

    @pl.when(h_idx == pl.num_programs(1) - 1)
    def _():
        o_ref[...] = (acc_ref[...] + b2_ref[...].astype(jnp.float32)
                      ).astype(o_ref.dtype)


@functools.partial(jax.jit, static_argnames=("tm", "th"))
def feed_forward(x, w1, b1, w2, b2, *, tm=None, th=None):
    """x: (B, S, D); w1: (D, H); b1: (H,); w2: (H, D); b2: (D,)."""
    B, S, D = x.shape
    H = w1.shape[1]
    M = B * S

    sub = 16 if x.dtype == jnp.bfloat16 else 8   # sublane packing
    Dp = _round_up(D, 128)                        # lane-dense tiles / stores

    if tm is None:
        tm = _TM_PREF if M >= _TM_PREF else _round_up(M, sub)
    tm = max(sub, _round_up(tm, sub))
    Mp = _round_up(M, tm)

    Hp = _round_up(H, 128)
    if th is None:
        th = _TH_PREF if Hp > _TH_PREF else Hp
    th = max(128, _round_up(th, 128))
    Hp = _round_up(Hp, th)

    # Zero padding is mathematically inert: padded x columns / W1 rows add 0,
    # padded hidden units give GELU(0)=0 and contribute 0 through W2, padded
    # output columns are sliced off below.
    x2 = jnp.pad(x.reshape(M, D), ((0, Mp - M), (0, Dp - D)))
    w1p = jnp.pad(w1, ((0, Dp - D), (0, Hp - H)))
    b1p = jnp.pad(b1, (0, Hp - H)).reshape(1, Hp)
    w2p = jnp.pad(w2, ((0, Hp - H), (0, Dp - D)))
    b2p = jnp.pad(b2, (0, Dp - D)).reshape(1, Dp)

    # Explicit scoped-VMEM budget: tiles x double-buffering + f32 accumulator.
    dbl = 2
    vmem_est = (
        dbl * tm * Dp * x2.dtype.itemsize          # x tile
        + dbl * Dp * th * w1p.dtype.itemsize       # W1 slab
        + dbl * th * b1p.dtype.itemsize            # b1 slab
        + dbl * th * Dp * w2p.dtype.itemsize       # W2 slab
        + dbl * Dp * b2p.dtype.itemsize            # b2
        + dbl * tm * Dp * x2.dtype.itemsize        # out tile
        + tm * Dp * 4                              # f32 accumulator scratch
    )
    vmem_limit = min(max(int(vmem_est * 1.25) + (2 << 20), 32 << 20), 100 << 20)

    out = pl.pallas_call(
        _ffn_kernel,
        out_shape=jax.ShapeDtypeStruct((Mp, Dp), x.dtype),
        grid_spec=pltpu.PrefetchScalarGridSpec(
            num_scalar_prefetch=0,
            grid=(Mp // tm, Hp // th),
            in_specs=[
                pl.BlockSpec((tm, Dp), lambda i, h: (i, 0)),   # x row tile
                pl.BlockSpec((Dp, th), lambda i, h: (0, h)),   # W1 hidden slab
                pl.BlockSpec((1, th), lambda i, h: (0, h)),    # b1 hidden slab
                pl.BlockSpec((th, Dp), lambda i, h: (h, 0)),   # W2 hidden slab
                pl.BlockSpec((1, Dp), lambda i, h: (0, 0)),    # b2
            ],
            out_specs=pl.BlockSpec((tm, Dp), lambda i, h: (i, 0)),
            scratch_shapes=[pltpu.VMEM((tm, Dp), jnp.float32)],
        ),
        compiler_params=pltpu.CompilerParams(
            dimension_semantics=("parallel", "arbitrary"),
            vmem_limit_bytes=vmem_limit,
        ),
    )(x2, w1p, b1p, w2p, b2p)

    return out[:M, :D].reshape(B, S, D)


def _reference(x, w1, b1, w2, b2):
    h = jnp.einsum("bsd,dh->bsh", x.astype(jnp.float32),
                   w1.astype(jnp.float32)) + b1.astype(jnp.float32)
    g = 0.5 * h * (1.0 + jax.lax.erf(h * jnp.float32(_SQRT_HALF)))
    return (jnp.einsum("bsh,hd->bsd", g, w2.astype(jnp.float32))
            + b2.astype(jnp.float32)).astype(x.dtype)


def _make_params(key, D, H, dtype=jnp.float32):
    kx, k1, kb1, k2, kb2 = jax.random.split(key, 5)
    w1 = jax.random.uniform(k1, (D, H), dtype, -1.0 / (D ** 0.5), 1.0 / (D ** 0.5))
    b1 = jax.random.uniform(kb1, (H,), dtype, -1.0 / (D ** 0.5), 1.0 / (D ** 0.5))
    w2 = jax.random.uniform(k2, (H, D), dtype, -1.0 / (H ** 0.5), 1.0 / (H ** 0.5))
    b2 = jax.random.uniform(kb2, (D,), dtype, -1.0 / (H ** 0.5), 1.0 / (H ** 0.5))
    return kx, w1, b1, w2, b2


if __name__ == "__main__":
    # Test 1: small shapes consistent with the module (batch=2, seq=8, dim=32,
    # mult=4) using the automatic (single-block) tiling.
    B, S, D, MULT = 2, 8, 32, 4
    H = D * MULT
    kx, w1, b1, w2, b2 = _make_params(jax.random.PRNGKey(0), D, H)
    x = jax.random.normal(kx, (B, S, D), dtype=jnp.float32)

    out = jax.block_until_ready(feed_forward(x, w1, b1, w2, b2))
    ref = _reference(x, w1, b1, w2, b2)
    assert out.shape == (B, S, D)
    assert jnp.allclose(out, ref, atol=1e-4, rtol=1e-4), "mismatch vs reference (test 1)"

    # Test 2: force a multi-block grid (2 row tiles x 2 hidden slabs) to
    # exercise the accumulator init/finalize path and the parallel M axis.
    D2, MULT2 = 32, 8
    H2 = D2 * MULT2
    kx2, w1b, b1b, w2b, b2b = _make_params(jax.random.PRNGKey(1), D2, H2)
    x2 = jax.random.normal(kx2, (B, S, D2), dtype=jnp.float32)

    out2 = jax.block_until_ready(feed_forward(x2, w1b, b1b, w2b, b2b, tm=8, th=128))
    ref2 = _reference(x2, w1b, b1b, w2b, b2b)
    assert out2.shape == (B, S, D2)
    assert jnp.allclose(out2, ref2, atol=1e-4, rtol=1e-4), "mismatch vs reference (test 2)"

    print("KERNEL_OK")
</pallas_src>

<mosaic_0001>
module attributes {stable_mosaic.version = 11 : i64} {
  func.func @_ffn_kernel(%arg0: i32, %arg1: i32, %arg2: memref<16x128xf32, #tpu.memory_space<vmem>>, %arg3: memref<128x128xf32, #tpu.memory_space<vmem>>, %arg4: memref<1x128xf32, #tpu.memory_space<vmem>>, %arg5: memref<128x128xf32, #tpu.memory_space<vmem>>, %arg6: memref<1x128xf32, #tpu.memory_space<vmem>>, %arg7: memref<16x128xf32, #tpu.memory_space<vmem>>, %arg8: memref<16x128xf32, #tpu.memory_space<vmem>>) attributes {dimension_semantics = [#tpu.dimension_semantics<parallel>, #tpu.dimension_semantics<arbitrary>], iteration_bounds = array<i64: 1, 1>, scalar_prefetch = 0 : i64, scratch_operands = 1 : i64, tpu.core_type = #tpu.core_type<tc>, window_params = [{transform_indices = @transform_0, window_bounds = array<i64: 16, 128>}, {transform_indices = @transform_1, window_bounds = array<i64: 128, 128>}, {transform_indices = @transform_2, window_bounds = array<i64: 1, 128>}, {transform_indices = @transform_3, window_bounds = array<i64: 128, 128>}, {pipeline_mode = #tpu.pipeline_mode<synchronous>, transform_indices = @transform_4, window_bounds = array<i64: 1, 128>}, {transform_indices = @transform_5, window_bounds = array<i64: 16, 128>}]} {
    %c0_i32 = arith.constant 0 : i32
    %0 = arith.cmpi eq, %arg1, %c0_i32 : i32
    %1 = arith.extui %0 : i1 to i32
    %c0_i32_0 = arith.constant 0 : i32
    %2 = arith.cmpi ne, %1, %c0_i32_0 : i32
    scf.if %2 {
      %cst_18 = arith.constant 0.000000e+00 : f32
      %25 = vector.broadcast %cst_18 : f32 to vector<16x128xf32>
      %c0_19 = arith.constant 0 : index
      %c0_20 = arith.constant 0 : index
      %26 = vector.load %arg8[%c0_19, %c0_20] : memref<16x128xf32, #tpu.memory_space<vmem>>, vector<16x128xf32>
      tpu.vector_store %arg8[%c0_19, %c0_20], %25 {strides = array<i32>} : memref<16x128xf32, #tpu.memory_space<vmem>>, vector<16x128xf32>,
    } else {
    }
    %c0 = arith.constant 0 : index
    %c0_1 = arith.constant 0 : index
    %3 = vector.load %arg2[%c0, %c0_1] : memref<16x128xf32, #tpu.memory_space<vmem>>, vector<16x128xf32>
    %c0_2 = arith.constant 0 : index
    %c0_3 = arith.constant 0 : index
    %4 = vector.load %arg3[%c0_2, %c0_3] : memref<128x128xf32, #tpu.memory_space<vmem>>, vector<128x128xf32>
    %cst = arith.constant dense<0.000000e+00> : vector<16x128xf32>
    %5 = tpu.matmul %3, %4, %cst {dimension_numbers = #tpu.dot_dimension_numbers<[1], [0], [0], [1], [0, 0, 1, 1], [], []>} : vector<16x128xf32>, vector<128x128xf32>, vector<16x128xf32> -> vector<16x128xf32>
    %c0_4 = arith.constant 0 : index
    %c0_5 = arith.constant 0 : index
    %6 = vector.load %arg4[%c0_4, %c0_5] : memref<1x128xf32, #tpu.memory_space<vmem>>, vector<1x128xf32>
    %7 = vector.broadcast %6 : vector<1x128xf32> to vector<16x128xf32>
    %8 = arith.addf %5, %7 : vector<16x128xf32>
    %cst_6 = arith.constant 5.000000e-01 : f32
    %9 = vector.broadcast %cst_6 : f32 to vector<16x128xf32>
    %10 = arith.mulf %9, %8 : vector<16x128xf32>
    %cst_7 = arith.constant 0.707106769 : f32
    %11 = vector.broadcast %cst_7 : f32 to vector<16x128xf32>
    %12 = arith.mulf %8, %11 : vector<16x128xf32>
    %13 = math.erf %12 : vector<16x128xf32>
    %cst_8 = arith.constant 1.000000e+00 : f32
    %14 = vector.broadcast %cst_8 : f32 to vector<16x128xf32>
    %15 = arith.addf %14, %13 : vector<16x128xf32>
    %16 = arith.mulf %10, %15 : vector<16x128xf32>
    %c0_9 = arith.constant 0 : index
    %c0_10 = arith.constant 0 : index
    %17 = vector.load %arg8[%c0_9, %c0_10] : memref<16x128xf32, #tpu.memory_space<vmem>>, vector<16x128xf32>
    %c0_11 = arith.constant 0 : index
    %c0_12 = arith.constant 0 : index
    %18 = vector.load %arg5[%c0_11, %c0_12] : memref<128x128xf32, #tpu.memory_space<vmem>>, vector<128x128xf32>
    %cst_13 = arith.constant dense<0.000000e+00> : vector<16x128xf32>
    %19 = tpu.matmul %16, %18, %cst_13 {dimension_numbers = #tpu.dot_dimension_numbers<[1], [0], [0], [1], [0, 0, 1, 1], [], []>} : vector<16x128xf32>, vector<128x128xf32>, vector<16x128xf32> -> vector<16x128xf32>
    %20 = arith.addf %17, %19 : vector<16x128xf32>
    %c0_14 = arith.constant 0 : index
    %c0_15 = arith.constant 0 : index
    %21 = vector.load %arg8[%c0_14, %c0_15] : memref<16x128xf32, #tpu.memory_space<vmem>>, vector<16x128xf32>
    tpu.vector_store %arg8[%c0_14, %c0_15], %20 {strides = array<i32>} : memref<16x128xf32, #tpu.memory_space<vmem>>, vector<16x128xf32>,
    %c0_i32_16 = arith.constant 0 : i32
    %22 = arith.cmpi eq, %arg1, %c0_i32_16 : i32
    %23 = arith.extui %22 : i1 to i32
    %c0_i32_17 = arith.constant 0 : i32
    %24 = arith.cmpi ne, %23, %c0_i32_17 : i32
    scf.if %24 {
      %c0_18 = arith.constant 0 : index
      %c0_19 = arith.constant 0 : index
      %25 = vector.load %arg8[%c0_18, %c0_19] : memref<16x128xf32, #tpu.memory_space<vmem>>, vector<16x128xf32>
      %c0_20 = arith.constant 0 : index
      %c0_21 = arith.constant 0 : index
      %26 = vector.load %arg6[%c0_20, %c0_21] : memref<1x128xf32, #tpu.memory_space<vmem>>, vector<1x128xf32>
      %27 = vector.broadcast %26 : vector<1x128xf32> to vector<16x128xf32>
      %28 = arith.addf %25, %27 : vector<16x128xf32>
      %c0_22 = arith.constant 0 : index
      %c0_23 = arith.constant 0 : index
      %29 = vector.load %arg7[%c0_22, %c0_23] : memref<16x128xf32, #tpu.memory_space<vmem>>, vector<16x128xf32>
      tpu.vector_store %arg7[%c0_22, %c0_23], %28 {strides = array<i32>} : memref<16x128xf32, #tpu.memory_space<vmem>>, vector<16x128xf32>,
    } else {
    }
    return
  }
  func.func @transform_0(%arg0: i32, %arg1: i32) -> (i32, i32) {
    %c0_i32 = arith.constant 0 : i32
    %c0_i32_0 = arith.constant 0 : i32
    return %arg0, %c0_i32 : i32, i32
  }
  func.func @transform_1(%arg0: i32, %arg1: i32) -> (i32, i32) {
    %c0_i32 = arith.constant 0 : i32
    %c0_i32_0 = arith.constant 0 : i32
    return %c0_i32, %arg1 : i32, i32
  }
  func.func @transform_2(%arg0: i32, %arg1: i32) -> (i32, i32) {
    %c0_i32 = arith.constant 0 : i32
    %c0_i32_0 = arith.constant 0 : i32
    return %c0_i32, %arg1 : i32, i32
  }
  func.func @transform_3(%arg0: i32, %arg1: i32) -> (i32, i32) {
    %c0_i32 = arith.constant 0 : i32
    %c0_i32_0 = arith.constant 0 : i32
    return %arg1, %c0_i32 : i32, i32
  }
  func.func @transform_4(%arg0: i32, %arg1: i32) -> (i32, i32) {
    %c0_i32 = arith.constant 0 : i32
    %c0_i32_0 = arith.constant 0 : i32
    %c0_i32_1 = arith.constant 0 : i32
    return %c0_i32, %c0_i32_0 : i32, i32
  }
  func.func @transform_5(%arg0: i32, %arg1: i32) -> (i32, i32) {
    %c0_i32 = arith.constant 0 : i32
    %c0_i32_0 = arith.constant 0 : i32
    return %arg0, %c0_i32 : i32, i32
  }
}

</mosaic_0001>

<llo_original>
// kernel: feed_forward.1
$region0: #{feed_forward.1}
  #allocation0 [shape = 'u32[]', space=smem, size = 0x4, offset = 0x4, fixed_abs, tag = 'smem constant byte address 0x4 - core index']
  #allocation1 [shape = 'u32[72,128]{1,0:T(1,128)}', space=vmem, size = 0x9000, scoped, tag = 'internal scratch']
  #allocation2 [shape = 'f32[16,128]{1,0:T(8,128)}', space=vmem, size = 0x2000, scoped, tag = 'scratch operand']
  %s0 = inlined_call_operand.vmem [shape: f32[16,128], index: 0, kind: input, shape index: {}]
  %s1 = inlined_call_operand.vmem [shape: f32[128,128], index: 1, kind: input, shape index: {}]
  %s2 = inlined_call_operand.vmem [shape: f32[1,128], index: 2, kind: input, shape index: {}]
  %s3 = inlined_call_operand.vmem [shape: f32[128,128], index: 3, kind: input, shape index: {}]
  %s4 = inlined_call_operand.vmem [shape: f32[1,128], index: 4, kind: input, shape index: {}]
  %s5 = inlined_call_operand.vmem [shape: f32[16,128], index: 5, kind: output, shape index: {}]
  %s6 = sld [smem:[#allocation0]]
  $region38: #{feed_forward.1} parent=0
    _
  %s8 = ssub.s32 1, %s6
  %s9 = scalar_select 0, %s8, %s6
  // Predicated region
  $region2: #{feed_forward.1} parent=0 // pred_check
    _
  $region3: #{feed_forward.1} parent=0 // pred_check_branch
    %11 = sbr.rel (0) target = $region5
  $region4: #{feed_forward.1} parent=0 // pred_region
    _
  $region5: #{feed_forward.1} parent=0 // pred_fallthru
    _
  // Predicated region
  $region6: #{feed_forward.1} parent=0 // pred_check
    _
  $region7: #{feed_forward.1} parent=0 // pred_check_branch
    %13 = sbr.rel (0) target = $region9
  $region8: #{feed_forward.1} parent=0 // pred_region
    _
  $region9: #{feed_forward.1} parent=0 // pred_fallthru
    _
  // Predicated region
  $region10: #{feed_forward.1} parent=0 // pred_check
    _
  $region11: #{feed_forward.1} parent=0 // pred_check_branch
    %15 = sbr.rel (0) target = $region13
  $region12: #{feed_forward.1} parent=0 // pred_region
    _
  $region13: #{feed_forward.1} parent=0 // pred_fallthru
    _
  // Predicated region
  $region14: #{feed_forward.1} parent=0 // pred_check
    _
  $region15: #{feed_forward.1} parent=0 // pred_check_branch
    %17 = sbr.rel (0) target = $region17
  $region16: #{feed_forward.1} parent=0 // pred_region
    _
  $region17: #{feed_forward.1} parent=0 // pred_fallthru
    _
  // Predicated region
  $region18: #{feed_forward.1} parent=0 // pred_check
    _
  $region19: #{feed_forward.1} parent=0 // pred_check_branch
    %19 = sbr.rel (0) target = $region21
  $region20: #{feed_forward.1} parent=0 // pred_region
    _
  $region21: #{feed_forward.1} parent=0 // pred_fallthru
    _
  %p20 = scmp.eq.s32.totalorder 0, 0
  // Predicated region
  $region22: #{feed_forward.1} parent=0 // pred_check
    %p21 = pneg %p20
  $region23: #{feed_forward.1} parent=0 // pred_check_branch
    %23 = sbr.rel (%p21) target = $region25
  $region24: #{feed_forward.1} parent=0 // pred_region
    %24 = vst [vmem:[#allocation2] sm:$0xff] 0.0
    %25 = vst [vmem:[#allocation2 + $0x8] sm:$0xff] 0.0
  $region25: #{feed_forward.1} parent=0 // pred_fallthru
    _
  %v26 = vld [vmem:[%s0] sm:$0xff]
  %v27 = vld [vmem:[%s0 + $0x8] sm:$0xff]
  %v28 = vld [vmem:[%s1] sm:$0xff]
  %v29 = vld [vmem:[%s1 + $0x8] sm:$0xff]
  %v30 = vld [vmem:[%s1 + $0x10] sm:$0xff]
  %v31 = vld [vmem:[%s1 + $0x18] sm:$0xff]
  %v32 = vld [vmem:[%s1 + $0x20] sm:$0xff]
  %v33 = vld [vmem:[%s1 + $0x28] sm:$0xff]
  %v34 = vld [vmem:[%s1 + $0x30] sm:$0xff]
  %v35 = vld [vmem:[%s1 + $0x38] sm:$0xff]
  %v36 = vld [vmem:[%s1 + $0x40] sm:$0xff]
  %v37 = vld [vmem:[%s1 + $0x48] sm:$0xff]
  %v38 = vld [vmem:[%s1 + $0x50] sm:$0xff]
  %v39 = vld [vmem:[%s1 + $0x58] sm:$0xff]
  %v40 = vld [vmem:[%s1 + $0x60] sm:$0xff]
  %v41 = vld [vmem:[%s1 + $0x68] sm:$0xff]
  %v42 = vld [vmem:[%s1 + $0x70] sm:$0xff]
  %v43 = vld [vmem:[%s1 + $0x78] sm:$0xff]
  %v44 = vld [vmem:[%s2] sm:$0x1]
  %v46 = vperm.slane %v44, 0
  %48 = vmatpush.msra.mxu0 %v43
  %49 = vmatpush.msra.mxu0 %v42
  %50 = vmatpush.msra.mxu0 %v41
  %51 = vmatpush.msra.mxu0 %v40
  %52 = vmatpush.msra.mxu0 %v39
  %53 = vmatpush.msra.mxu0 %v38
  %54 = vmatpush.msra.mxu0 %v37
  %55 = vmatpush.msra.mxu0 %v36
  %56 = vmatpush.msra.mxu0 %v35
  %57 = vmatpush.msra.mxu0 %v34
  %58 = vmatpush.msra.mxu0 %v33
  %59 = vmatpush.msra.mxu0 %v32
  %60 = vmatpush.msra.mxu0 %v31
  %61 = vmatpush.msra.mxu0 %v30
  %62 = vmatpush.msra.mxu0 %v29
  %63 = vmatpush.msra.mxu0 %v28
  %64 = vmatmul.f32.gmra.mxu0 %v26
  %v65 = vpop.f32.mrf.mxu0
  %v66 = vadd.f32 %v46, %v65
  %67 = vmatmul.f32.gmra.mxu0 %v27
  %v68 = vpop.f32.mrf.mxu0
  %v69 = vadd.f32 %v46, %v68
  %70 = vdwg.mxu0
  %v71 = vmul.f32 %v66, 0.5
  %v72 = vmul.f32 %v69, 0.5
  %v73 = vmul.f32 %v66, 0.70710677
  %v74 = vmul.f32 %v69, 0.70710677
  %v75 = vmul.f32 %v73, %v73
  %v76 = vmin.f32 16.0, %v75
  %v77 = vmul.f32 %v76, 2.1237322e-06
  %v78 = vadd.f32 %v77, 0.00028619796
  %v79 = vmul.f32 %v76, %v78
  %v80 = vadd.f32 %v79, 0.0036580483
  %v81 = vmul.f32 %v76, %v80
  %v82 = vadd.f32 %v81, 0.05243302
  %v83 = vmul.f32 %v76, %v82
  %v84 = vadd.f32 %v83, 0.18741608
  %v85 = vmul.f32 %v76, %v84
  %v86 = vadd.f32 %v85, 1.1283791
  %v87 = vmul.f32 %v73, %v86
  %v88 = vmul.f32 %v76, 3.8918573e-05
  %v89 = vadd.f32 %v88, 0.001143296
  %v90 = vmul.f32 %v76, %v89
  %v91 = vadd.f32 %v90, 0.014752088
  %v92 = vmul.f32 %v76, %v91
  %v93 = vadd.f32 %v92, 0.112945676
  %v94 = vmul.f32 %v76, %v93
  %v95 = vadd.f32 %v94, 0.4994258
  %v96 = vmul.f32 %v76, %v95
  %v97 = vadd.f32 %v96, 1.0
  %v98 = vrcp.pop %v97
  %v99 = vmul.f32 %v97, %v98
  %v100 = vsub.f32 1.0, %v99
  %v101 = vmul.f32 %v98, %v100
  %v102 = vadd.f32 %v98, %v101
  %vm103 = vweird.f32 %v97
  %vm104 = vweird.f32 %v98
  %vm105 = vmor %vm103, %vm104
  %v106 = vsel %vm105, %v98, %v102
  %v107 = vand.u32 2147483647, %v97
  %vm108 = vcmp.eq.f32.partialorder %v107, 8.507059e+37
  %v109 = vand.u32 %v97, 2147483648
  %v110 = vor.u32 1.1754944e-38, %v109
  %v111 = vsel %vm108, %v110, %v106
  %v112 = vmul.f32 %v87, %v111
  %v113 = vmin.f32 %v112, 1.0
  %v114 = vmax.f32 %v113, -1.0
  %v115 = vmul.f32 %v74, %v74
  %v116 = vmin.f32 16.0, %v115
  %v117 = vmul.f32 %v116, 2.1237322e-06
  %v118 = vadd.f32 %v117, 0.00028619796
  %v119 = vmul.f32 %v116, %v118
  %v120 = vadd.f32 %v119, 0.0036580483
  %v121 = vmul.f32 %v116, %v120
  %v122 = vadd.f32 %v121, 0.05243302
  %v123 = vmul.f32 %v116, %v122
  %v124 = vadd.f32 %v123, 0.18741608
  %v125 = vmul.f32 %v116, %v124
  %v126 = vadd.f32 %v125, 1.1283791
  %v127 = vmul.f32 %v74, %v126
  %v128 = vmul.f32 %v116, 3.8918573e-05
  %v129 = vadd.f32 %v128, 0.001143296
  %v130 = vmul.f32 %v116, %v129
  %v131 = vadd.f32 %v130, 0.014752088
  %v132 = vmul.f32 %v116, %v131
  %v133 = vadd.f32 %v132, 0.112945676
  %v134 = vmul.f32 %v116, %v133
  %v135 = vadd.f32 %v134, 0.4994258
  %v136 = vmul.f32 %v116, %v135
  %v137 = vadd.f32 %v136, 1.0
  %v138 = vrcp.pop %v137
  %v139 = vmul.f32 %v137, %v138
  %v140 = vsub.f32 1.0, %v139
  %v141 = vmul.f32 %v138, %v140
  %v142 = vadd.f32 %v138, %v141
  %vm143 = vweird.f32 %v137
  %vm144 = vweird.f32 %v138
  %vm145 = vmor %vm143, %vm144
  %v146 = vsel %vm145, %v138, %v142
  %v147 = vand.u32 2147483647, %v137
  %vm148 = vcmp.eq.f32.partialorder %v147, 8.507059e+37
  %v149 = vand.u32 %v137, 2147483648
  %v150 = vor.u32 1.1754944e-38, %v149
  %v151 = vsel %vm148, %v150, %v146
  %v152 = vmul.f32 %v127, %v151
  %v153 = vmin.f32 %v152, 1.0
  %v154 = vmax.f32 %v153, -1.0
  %v155 = vadd.f32 %v114, 1.0
  %v156 = vadd.f32 %v154, 1.0
  %v157 = vmul.f32 %v71, %v155
  %v158 = vmul.f32 %v72, %v156
  %v159 = vld [vmem:[#allocation2] sm:$0xff]
  %v160 = vld [vmem:[#allocation2 + $0x8] sm:$0xff]
  %v161 = vld [vmem:[%s3] sm:$0xff]
  %v162 = vld [vmem:[%s3 + $0x8] sm:$0xff]
  %v163 = vld [vmem:[%s3 + $0x10] sm:$0xff]
  %v164 = vld [vmem:[%s3 + $0x18] sm:$0xff]
  %v165 = vld [vmem:[%s3 + $0x20] sm:$0xff]
  %v166 = vld [vmem:[%s3 + $0x28] sm:$0xff]
  %v167 = vld [vmem:[%s3 + $0x30] sm:$0xff]
  %v168 = vld [vmem:[%s3 + $0x38] sm:$0xff]
  %v169 = vld [vmem:[%s3 + $0x40] sm:$0xff]
  %v170 = vld [vmem:[%s3 + $0x48] sm:$0xff]
  %v171 = vld [vmem:[%s3 + $0x50] sm:$0xff]
  %v172 = vld [vmem:[%s3 + $0x58] sm:$0xff]
  %v173 = vld [vmem:[%s3 + $0x60] sm:$0xff]
  %v174 = vld [vmem:[%s3 + $0x68] sm:$0xff]
  %v175 = vld [vmem:[%s3 + $0x70] sm:$0xff]
  %v176 = vld [vmem:[%s3 + $0x78] sm:$0xff]
  %177 = vmatpush.msra.mxu0 %v176
  %178 = vmatpush.msra.mxu0 %v175
  %179 = vmatpush.msra.mxu0 %v174
  %180 = vmatpush.msra.mxu0 %v173
  %181 = vmatpush.msra.mxu0 %v172
  %182 = vmatpush.msra.mxu0 %v171
  %183 = vmatpush.msra.mxu0 %v170
  %184 = vmatpush.msra.mxu0 %v169
  %185 = vmatpush.msra.mxu0 %v168
  %186 = vmatpush.msra.mxu0 %v167
  %187 = vmatpush.msra.mxu0 %v166
  %188 = vmatpush.msra.mxu0 %v165
  %189 = vmatpush.msra.mxu0 %v164
  %190 = vmatpush.msra.mxu0 %v163
  %191 = vmatpush.msra.mxu0 %v162
  %192 = vmatpush.msra.mxu0 %v161
  %193 = vmatmul.f32.gmra.mxu0 %v157
  %v194 = vpop.f32.mrf.mxu0
  %v195 = vadd.f32 0.0, %v194
  %196 = vmatmul.f32.gmra.mxu0 %v158
  %v197 = vpop.f32.mrf.mxu0
  %v198 = vadd.f32 0.0, %v197
  %199 = vdwg.mxu0
  %v200 = vadd.f32 %v159, %v195
  %v201 = vadd.f32 %v160, %v198
  %202 = vst [vmem:[#allocation2] sm:$0xff] %v200
  %203 = vst [vmem:[#allocation2 + $0x8] sm:$0xff] %v201
  // Predicated region
  $region26: #{feed_forward.1} parent=0 // pred_check
    %p204 = pneg %p20
  $region27: #{feed_forward.1} parent=0 // pred_check_branch
    %206 = sbr.rel (%p204) target = $region29
  $region28: #{feed_forward.1} parent=0 // pred_region
    %v207 = vld [vmem:[#allocation2] sm:$0xff]
    %v208 = vld [vmem:[#allocation2 + $0x8] sm:$0xff]
    %v209 = vld [vmem:[%s4] sm:$0x1]
    %v211 = vperm.slane %v209, 0
    %v213 = vadd.f32 %v207, %v211
    %v214 = vadd.f32 %v208, %v211
    %215 = vst [vmem:[%s5] sm:$0xff] %v213
    %216 = vst [vmem:[%s5 + $0x8] sm:$0xff] %v214
  $region29: #{feed_forward.1} parent=0 // pred_fallthru
    _
  // Predicated region
  $region30: #{feed_forward.1} parent=0 // pred_check
    _
  $region31: #{feed_forward.1} parent=0 // pred_check_branch
    %218 = sbr.rel (0) target = $region33
  $region32: #{feed_forward.1} parent=0 // pred_region
    _
  $region33: #{feed_forward.1} parent=0 // pred_fallthru
    _
  // Predicated region
  $region34: #{feed_forward.1} parent=0 // pred_check
    _
  $region35: #{feed_forward.1} parent=0 // pred_check_branch
    %220 = sbr.rel (0) target = $region37
  $region36: #{feed_forward.1} parent=0 // pred_region
    _
  $region37: #{feed_forward.1} parent=0 // pred_fallthru
    _

</llo_original>
